<compile_context>
chip_gen: v6e
topology: v6e:2x2x1
jax: 0.10.0
libtpu: 0.0.40
codegen_flags: <defaults>
</compile_context>

<pallas_src>
import jax
import jax.numpy as jnp
from jax.experimental import pallas as pl
from jax.experimental.pallas import tpu as pltpu

LANE = 128  # TPU lane width


def _round_up(x, m):
    return (x + m - 1) // m * m


def controlnet_vae_kernel(xe_ref, w_ref, b_ref, out_ref):
    """One grid step processes a (TB, .) batch tile.

    xe_ref : (TB, 256)   cols [0,128) = x (zero-padded past 117), cols [128,256) = eps (zero-padded past 58)
    w_ref  : (256, 640)  cols [0,256)   : rows [0,128) = W1 padded, rows [128,256) = W3 padded
                         cols [256,512) : fused W2  (mu weights in lanes [0,58), logvar weights in [128,186))
                         cols [512,640) : W4 padded
    b_ref  : (4, 256)    row0 = b1, row1 = fused b2 (b21 in [0,58), b22 in [128,186)), row2 = b3, row3 = b4 padded
    out_ref: (TB, 384)   cols [0,128) recon (padded), [128,256) mu (padded), [256,384) logvar (padded)
    """
    lane = xe_ref.shape[1] // 2     # 128
    hid = b_ref.shape[1]            # 256

    x = xe_ref[:, 0:lane]           # (TB, 128)
    eps = xe_ref[:, lane:2 * lane]  # (TB, 128), zeros past lane 57

    # Static, tile-aligned views into the packed weight slab.
    w1 = w_ref[0:lane, 0:hid]                            # (128, 256)
    w3 = w_ref[lane:2 * lane, 0:hid]                     # (128, 256)
    w2 = w_ref[:, hid:hid + 2 * lane]                    # (256, 256) fused mu|logvar
    w4 = w_ref[:, hid + 2 * lane:hid + 3 * lane]         # (256, 128)

    b1 = b_ref[0:1, :]              # (1, 256)
    b2 = b_ref[1:2, :]              # (1, 256)
    b3 = b_ref[2:3, :]              # (1, 256)
    b4 = b_ref[3:4, 0:lane]         # (1, 128)

    # encode: h1 = relu(ln1(x))
    h1 = jnp.maximum(jnp.dot(x, w1, preferred_element_type=jnp.float32) + b1, 0.0)

    # fused mu/logvar projection: one MXU dot, lane-aligned halves.
    y = jnp.dot(h1, w2, preferred_element_type=jnp.float32) + b2        # (TB, 256)
    mu_p = y[:, 0:lane]             # mu in lanes [0,58), zeros elsewhere
    lv_p = y[:, lane:2 * lane]      # logvar in lanes [0,58), zeros elsewhere

    # reparameterize: z = mu + eps * exp(0.5 * logvar)  (padded lanes stay exactly 0)
    z_p = mu_p + eps * jnp.exp(0.5 * lv_p)                               # (TB, 128)

    # decode: out = ln4(relu(ln3(z)))
    h3 = jnp.maximum(jnp.dot(z_p, w3, preferred_element_type=jnp.float32) + b3, 0.0)
    recon_p = jnp.dot(h3, w4, preferred_element_type=jnp.float32) + b4   # (TB, 128)

    # lane-dense, unmasked stores into the packed output slab
    out_ref[:, 0:lane] = recon_p.astype(out_ref.dtype)
    out_ref[:, lane:2 * lane] = mu_p.astype(out_ref.dtype)
    out_ref[:, 2 * lane:3 * lane] = lv_p.astype(out_ref.dtype)


def pack_params(params):
    """Pack 10 parameter tensors into one (256,640) weight slab + one (4,256) bias slab."""
    f32 = jnp.float32
    w1 = params["w1"].astype(f32)    # (117, 256)
    w21 = params["w21"].astype(f32)  # (256, 58)
    w22 = params["w22"].astype(f32)  # (256, 58)
    w3 = params["w3"].astype(f32)    # (58, 256)
    w4 = params["w4"].astype(f32)    # (256, 117)

    in_dim, hid = w1.shape
    lat = w21.shape[1]
    out_dim = w4.shape[1]
    assert hid == 2 * LANE, "packing layout assumes hidden width 256"
    assert in_dim <= LANE and lat <= LANE and out_dim <= LANE

    w1p = jnp.zeros((LANE, hid), f32).at[:in_dim, :].set(w1)
    w3p = jnp.zeros((LANE, hid), f32).at[:lat, :].set(w3)
    wA = jnp.concatenate([w1p, w3p], axis=0)                 # (256, 256)

    w2big = jnp.zeros((hid, 2 * LANE), f32)
    w2big = w2big.at[:, :lat].set(w21)                       # mu head -> lanes [0,58)
    w2big = w2big.at[:, LANE:LANE + lat].set(w22)            # logvar head -> lanes [128,186)

    w4p = jnp.zeros((hid, LANE), f32).at[:, :out_dim].set(w4)

    w_slab = jnp.concatenate([wA, w2big, w4p], axis=1)       # (256, 640)

    b_slab = jnp.zeros((4, hid), f32)
    b_slab = b_slab.at[0, :].set(params["b1"].reshape(-1).astype(f32))
    b_slab = b_slab.at[1, :lat].set(params["b21"].reshape(-1).astype(f32))
    b_slab = b_slab.at[1, LANE:LANE + lat].set(params["b22"].reshape(-1).astype(f32))
    b_slab = b_slab.at[2, :].set(params["b3"].reshape(-1).astype(f32))
    b_slab = b_slab.at[3, :out_dim].set(params["b4"].reshape(-1).astype(f32))
    return w_slab, b_slab


def controlnet_vae_forward(x, eps, params):
    """x: (B, 117), eps: (B, 58). Returns (recon (B,117), mu (B,58), logvar (B,58))."""
    B, in_dim = x.shape
    lat = eps.shape[1]
    hid = params["w1"].shape[1]
    out_dim = params["w4"].shape[1]

    w_slab, b_slab = pack_params(params)

    # Batch tiling: up to 256 rows per grid step; grid axis is 'parallel' (megacore / v7x 2-TC).
    tb = min(256, _round_up(B, 8))
    b_pad = _round_up(B, tb)

    xe = jnp.zeros((b_pad, 2 * LANE), jnp.float32)
    xe = xe.at[:B, :in_dim].set(x.astype(jnp.float32))
    xe = xe.at[:B, LANE:LANE + lat].set(eps.astype(jnp.float32))

    flops = int(2 * b_pad * (in_dim * hid + hid * 2 * lat + lat * hid + hid * out_dim))
    bytes_accessed = int(4 * (xe.size + w_slab.size + b_slab.size + b_pad * 3 * LANE))
    cost = pl.CostEstimate(flops=flops,
                           transcendentals=int(b_pad * lat),
                           bytes_accessed=bytes_accessed)

    out = pl.pallas_call(
        controlnet_vae_kernel,
        out_shape=jax.ShapeDtypeStruct((b_pad, 3 * LANE), jnp.float32),
        grid_spec=pltpu.PrefetchScalarGridSpec(
            num_scalar_prefetch=0,
            grid=(b_pad // tb,),
            in_specs=[
                pl.BlockSpec((tb, 2 * LANE), lambda i: (i, 0)),            # packed x|eps tile
                pl.BlockSpec((hid, w_slab.shape[1]), lambda i: (0, 0)),    # weight slab, resident
                pl.BlockSpec((4, hid), lambda i: (0, 0)),                  # bias slab, resident
            ],
            out_specs=pl.BlockSpec((tb, 3 * LANE), lambda i: (i, 0)),
        ),
        compiler_params=pltpu.CompilerParams(
            dimension_semantics=("parallel",),
            vmem_limit_bytes=32 * 1024 * 1024,
        ),
        cost_estimate=cost,
    )(xe, w_slab, b_slab)

    recon = out[:B, :out_dim]
    mu = out[:B, LANE:LANE + lat]
    logvar = out[:B, 2 * LANE:2 * LANE + lat]
    return recon, mu, logvar


def init_params(key, n_channels=9, hidden_channels=(256, 256), time_range=13,
                output_channel=None):
    in_dim = n_channels * time_range                 # 117
    latent = int(n_channels * time_range / 2)        # 58
    out_dim = in_dim if output_channel is None else output_channel

    def linear(key, fan_in, fan_out):
        kw, kb = jax.random.split(key)
        bound = 1.0 / jnp.sqrt(float(fan_in))
        w = jax.random.uniform(kw, (fan_in, fan_out), jnp.float32, -bound, bound)
        b = jax.random.uniform(kb, (1, fan_out), jnp.float32, -bound, bound)
        return w, b

    k1, k21, k22, k3, k4 = jax.random.split(key, 5)
    w1, b1 = linear(k1, in_dim, hidden_channels[0])
    w21, b21 = linear(k21, hidden_channels[0], latent)
    w22, b22 = linear(k22, hidden_channels[0], latent)
    w3, b3 = linear(k3, latent, hidden_channels[1])
    w4, b4 = linear(k4, hidden_channels[1], out_dim)
    return dict(w1=w1, b1=b1, w21=w21, b21=b21, w22=w22, b22=b22,
                w3=w3, b3=b3, w4=w4, b4=b4)


if __name__ == "__main__":
    key = jax.random.PRNGKey(0)
    k_param, k_x, k_eps = jax.random.split(key, 3)

    n_channels, time_range = 9, 13
    in_dim = n_channels * time_range            # 117
    latent = int(n_channels * time_range / 2)   # 58
    B = 8

    params = init_params(k_param, n_channels=n_channels, time_range=time_range)
    x = jax.random.normal(k_x, (B, in_dim), jnp.float32)
    eps = jax.random.normal(k_eps, (B, latent), jnp.float32)  # randn_like(std)

    recon, mu, logvar = controlnet_vae_forward(x, eps, params)
    jax.block_until_ready((recon, mu, logvar))

    # Pure-JAX reference (same eps) to verify kernel semantics.
    h1 = jnp.maximum(x @ params["w1"] + params["b1"], 0.0)
    mu_ref = h1 @ params["w21"] + params["b21"]
    lv_ref = h1 @ params["w22"] + params["b22"]
    z_ref = mu_ref + eps * jnp.exp(0.5 * lv_ref)
    h3 = jnp.maximum(z_ref @ params["w3"] + params["b3"], 0.0)
    recon_ref = h3 @ params["w4"] + params["b4"]

    assert recon.shape == (B, in_dim) and mu.shape == (B, latent) and logvar.shape == (B, latent)
    assert jnp.allclose(recon, recon_ref, atol=1e-4, rtol=1e-4)
    assert jnp.allclose(mu, mu_ref, atol=1e-5, rtol=1e-5)
    assert jnp.allclose(logvar, lv_ref, atol=1e-5, rtol=1e-5)

    print("KERNEL_OK")
</pallas_src>

<mosaic_0001>
module attributes {stable_mosaic.version = 11 : i64} {
  func.func @controlnet_vae_kernel(%arg0: i32, %arg1: memref<8x256xf32, #tpu.memory_space<vmem>>, %arg2: memref<256x640xf32, #tpu.memory_space<vmem>>, %arg3: memref<4x256xf32, #tpu.memory_space<vmem>>, %arg4: memref<8x384xf32, #tpu.memory_space<vmem>>) attributes {dimension_semantics = [#tpu.dimension_semantics<parallel>], iteration_bounds = array<i64: 1>, scalar_prefetch = 0 : i64, scratch_operands = 0 : i64, tpu.core_type = #tpu.core_type<tc>, window_params = [{transform_indices = @transform_0, window_bounds = array<i64: 8, 256>}, {pipeline_mode = #tpu.pipeline_mode<synchronous>, transform_indices = @transform_1, window_bounds = array<i64: 256, 640>}, {pipeline_mode = #tpu.pipeline_mode<synchronous>, transform_indices = @transform_2, window_bounds = array<i64: 4, 256>}, {transform_indices = @transform_3, window_bounds = array<i64: 8, 384>}]} {
    %c0 = arith.constant 0 : index
    %c0_0 = arith.constant 0 : index
    %0 = vector.load %arg1[%c0, %c0_0] : memref<8x256xf32, #tpu.memory_space<vmem>>, vector<8x128xf32>
    %c0_1 = arith.constant 0 : index
    %c128 = arith.constant 128 : index
    %1 = vector.load %arg1[%c0_1, %c128] : memref<8x256xf32, #tpu.memory_space<vmem>>, vector<8x128xf32>
    %c0_2 = arith.constant 0 : index
    %c0_3 = arith.constant 0 : index
    %2 = vector.load %arg2[%c0_2, %c0_3] : memref<256x640xf32, #tpu.memory_space<vmem>>, vector<128x256xf32>
    %c128_4 = arith.constant 128 : index
    %c0_5 = arith.constant 0 : index
    %3 = vector.load %arg2[%c128_4, %c0_5] : memref<256x640xf32, #tpu.memory_space<vmem>>, vector<128x256xf32>
    %c0_6 = arith.constant 0 : index
    %c256 = arith.constant 256 : index
    %4 = vector.load %arg2[%c0_6, %c256] : memref<256x640xf32, #tpu.memory_space<vmem>>, vector<256x256xf32>
    %c0_7 = arith.constant 0 : index
    %c512 = arith.constant 512 : index
    %5 = vector.load %arg2[%c0_7, %c512] : memref<256x640xf32, #tpu.memory_space<vmem>>, vector<256x128xf32>
    %c0_8 = arith.constant 0 : index
    %c0_9 = arith.constant 0 : index
    %6 = vector.load %arg3[%c0_8, %c0_9] : memref<4x256xf32, #tpu.memory_space<vmem>>, vector<1x256xf32>
    %c1 = arith.constant 1 : index
    %c0_10 = arith.constant 0 : index
    %7 = vector.load %arg3[%c1, %c0_10] : memref<4x256xf32, #tpu.memory_space<vmem>>, vector<1x256xf32>
    %c2 = arith.constant 2 : index
    %c0_11 = arith.constant 0 : index
    %8 = vector.load %arg3[%c2, %c0_11] : memref<4x256xf32, #tpu.memory_space<vmem>>, vector<1x256xf32>
    %c3 = arith.constant 3 : index
    %c0_12 = arith.constant 0 : index
    %9 = vector.load %arg3[%c3, %c0_12] : memref<4x256xf32, #tpu.memory_space<vmem>>, vector<1x128xf32>
    %cst = arith.constant dense<0.000000e+00> : vector<8x256xf32>
    %10 = tpu.matmul %0, %2, %cst {dimension_numbers = #tpu.dot_dimension_numbers<[1], [0], [0], [1], [0, 0, 1, 1], [], []>} : vector<8x128xf32>, vector<128x256xf32>, vector<8x256xf32> -> vector<8x256xf32>
    %11 = vector.broadcast %6 : vector<1x256xf32> to vector<8x256xf32>
    %12 = arith.addf %10, %11 : vector<8x256xf32>
    %cst_13 = arith.constant 0.000000e+00 : f32
    %13 = vector.broadcast %cst_13 : f32 to vector<8x256xf32>
    %14 = arith.maximumf %12, %13 : vector<8x256xf32>
    %cst_14 = arith.constant dense<0.000000e+00> : vector<8x256xf32>
    %15 = tpu.matmul %14, %4, %cst_14 {dimension_numbers = #tpu.dot_dimension_numbers<[1], [0], [0], [1], [0, 0, 1, 1], [], []>} : vector<8x256xf32>, vector<256x256xf32>, vector<8x256xf32> -> vector<8x256xf32>
    %16 = vector.broadcast %7 : vector<1x256xf32> to vector<8x256xf32>
    %17 = arith.addf %15, %16 : vector<8x256xf32>
    %18 = vector.extract_strided_slice %17 {offsets = [0, 0], sizes = [8, 128], strides = [1, 1]} : vector<8x256xf32> to vector<8x128xf32>
    %19 = vector.extract_strided_slice %17 {offsets = [0, 128], sizes = [8, 128], strides = [1, 1]} : vector<8x256xf32> to vector<8x128xf32>
    %cst_15 = arith.constant 5.000000e-01 : f32
    %20 = vector.broadcast %cst_15 : f32 to vector<8x128xf32>
    %21 = arith.mulf %20, %19 : vector<8x128xf32>
    %22 = math.exp %21 : vector<8x128xf32>
    %23 = arith.mulf %1, %22 : vector<8x128xf32>
    %24 = arith.addf %18, %23 : vector<8x128xf32>
    %cst_16 = arith.constant dense<0.000000e+00> : vector<8x256xf32>
    %25 = tpu.matmul %24, %3, %cst_16 {dimension_numbers = #tpu.dot_dimension_numbers<[1], [0], [0], [1], [0, 0, 1, 1], [], []>} : vector<8x128xf32>, vector<128x256xf32>, vector<8x256xf32> -> vector<8x256xf32>
    %26 = vector.broadcast %8 : vector<1x256xf32> to vector<8x256xf32>
    %27 = arith.addf %25, %26 : vector<8x256xf32>
    %cst_17 = arith.constant 0.000000e+00 : f32
    %28 = vector.broadcast %cst_17 : f32 to vector<8x256xf32>
    %29 = arith.maximumf %27, %28 : vector<8x256xf32>
    %cst_18 = arith.constant dense<0.000000e+00> : vector<8x128xf32>
    %30 = tpu.matmul %29, %5, %cst_18 {dimension_numbers = #tpu.dot_dimension_numbers<[1], [0], [0], [1], [0, 0, 1, 1], [], []>} : vector<8x256xf32>, vector<256x128xf32>, vector<8x128xf32> -> vector<8x128xf32>
    %31 = vector.broadcast %9 : vector<1x128xf32> to vector<8x128xf32>
    %32 = arith.addf %30, %31 : vector<8x128xf32>
    %c0_19 = arith.constant 0 : index
    %c0_20 = arith.constant 0 : index
    %33 = vector.load %arg4[%c0_19, %c0_20] : memref<8x384xf32, #tpu.memory_space<vmem>>, vector<8x128xf32>
    tpu.vector_store %arg4[%c0_19, %c0_20], %32 {strides = array<i32>} : memref<8x384xf32, #tpu.memory_space<vmem>>, vector<8x128xf32>,
    %c0_21 = arith.constant 0 : index
    %c128_22 = arith.constant 128 : index
    %34 = vector.load %arg4[%c0_21, %c128_22] : memref<8x384xf32, #tpu.memory_space<vmem>>, vector<8x128xf32>
    tpu.vector_store %arg4[%c0_21, %c128_22], %18 {strides = array<i32>} : memref<8x384xf32, #tpu.memory_space<vmem>>, vector<8x128xf32>,
    %c0_23 = arith.constant 0 : index
    %c256_24 = arith.constant 256 : index
    %35 = vector.load %arg4[%c0_23, %c256_24] : memref<8x384xf32, #tpu.memory_space<vmem>>, vector<8x128xf32>
    tpu.vector_store %arg4[%c0_23, %c256_24], %19 {strides = array<i32>} : memref<8x384xf32, #tpu.memory_space<vmem>>, vector<8x128xf32>,
    return
  }
  func.func @transform_0(%arg0: i32) -> (i32, i32) {
    %c0_i32 = arith.constant 0 : i32
    %c0_i32_0 = arith.constant 0 : i32
    return %arg0, %c0_i32 : i32, i32
  }
  func.func @transform_1(%arg0: i32) -> (i32, i32) {
    %c0_i32 = arith.constant 0 : i32
    %c0_i32_0 = arith.constant 0 : i32
    %c0_i32_1 = arith.constant 0 : i32
    return %c0_i32, %c0_i32_0 : i32, i32
  }
  func.func @transform_2(%arg0: i32) -> (i32, i32) {
    %c0_i32 = arith.constant 0 : i32
    %c0_i32_0 = arith.constant 0 : i32
    %c0_i32_1 = arith.constant 0 : i32
    return %c0_i32, %c0_i32_0 : i32, i32
  }
  func.func @transform_3(%arg0: i32) -> (i32, i32) {
    %c0_i32 = arith.constant 0 : i32
    %c0_i32_0 = arith.constant 0 : i32
    return %arg0, %c0_i32 : i32, i32
  }
}

</mosaic_0001>

<llo_original>
// kernel: tpu_custom_call.1
$region0: #{tpu_custom_call.1}
  #allocation0 [shape = 'u32[]', space=smem, size = 0x4, offset = 0x4, fixed_abs, tag = 'smem constant byte address 0x4 - core index']
  #allocation1 [shape = 'u32[144,128]{1,0:T(1,128)}', space=vmem, size = 0x12000, scoped, tag = 'internal scratch']
  %s0 = inlined_call_operand.hbm [shape: f32[8,256], index: 0, kind: input, shape index: {}]
  %s1 = inlined_call_operand.hbm [shape: f32[256,640], index: 1, kind: input, shape index: {}]
  %s2 = inlined_call_operand.hbm [shape: f32[4,256], index: 2, kind: input, shape index: {}]
  %s3 = inlined_call_operand.hbm [shape: f32[8,384], index: 3, kind: output, shape index: {}]
  %s4 = sld [smem:[#allocation0]]
  $region34: #{tpu_custom_call.1} parent=0
    _
  %s6 = ssub.s32 1, %s4
  %s7 = scalar_select 0, %s6, %s4
  $region1: #{tpu_custom_call.1} parent=0
    #allocation2 [shape = 'u8[8192]{0}', space=vmem, size = 0x2000, scoped, tag = 'input window, operand 0, single buffered']
    #allocation3 [shape = 's32[1]{0}', space=sflag, size = 0x4, scoped, tag = 'scoped memory for tpu_custom_call.1']
    #allocation4 [shape = 's32[1]{0}', space=sflag, size = 0x4, scoped, tag = 'scoped memory for tpu_custom_call.1']
    #allocation5 [shape = 'u8[655360]{0}', space=vmem, size = 0xa0000, scoped, tag = 'input window, operand 1, single buffered']
    #allocation6 [shape = 's32[1]{0}', space=sflag, size = 0x4, scoped, tag = 'scoped memory for tpu_custom_call.1']
    #allocation7 [shape = 'u8[4096]{0}', space=vmem, size = 0x1000, scoped, tag = 'input window, operand 2, single buffered']
    #allocation8 [shape = 'u8[12288]{0}', space=vmem, size = 0x3000, scoped, tag = 'output window, operand 0, single buffered']
    %8 = vsyncpa [#allocation3], 0
    %9 = vsyncpa [#allocation6], 0
    %10 = vsyncpa [#allocation4], 0
    // Predicated region
    $region2: #{tpu_custom_call.1} parent=1 // pred_check
      _
    $region3: #{tpu_custom_call.1} parent=1 // pred_check_branch
      %12 = sbr.rel (0) target = $region5
    $region4: #{tpu_custom_call.1} parent=1 // pred_region
      %s14 = ssub.s32 256, 256
      %15 = vsyncadd [#allocation3], %s14
      %s17 = sshll.u32 [#allocation2], 4
      %s18 = int_to_ptr.vmem [resolvable:$true] %s17
      %20 = dma.hbm_to_vmem [thread:$0]  %s0, 256, %s18, [#allocation3]
    $region5: #{tpu_custom_call.1} parent=1 // pred_fallthru
      _
    // Predicated region
    $region6: #{tpu_custom_call.1} parent=1 // pred_check
      _
    $region7: #{tpu_custom_call.1} parent=1 // pred_check_branch
      %22 = sbr.rel (0) target = $region9
    $region8: #{tpu_custom_call.1} parent=1 // pred_region
      %s24 = ssub.s32 20480, 20480
      %25 = vsyncadd [#allocation6], %s24
      %s26 = sshll.u32 [#allocation5], 4
      %s27 = int_to_ptr.vmem [resolvable:$true] %s26
      %32 = dma.hbm_to_vmem [thread:$0]  %s1, 20480, %s27, [#allocation6], 640, 640, 40
    $region9: #{tpu_custom_call.1} parent=1 // pred_fallthru
      _
    // Predicated region
    $region10: #{tpu_custom_call.1} parent=1 // pred_check
      _
    $region11: #{tpu_custom_call.1} parent=1 // pred_check_branch
      %34 = sbr.rel (0) target = $region13
    $region12: #{tpu_custom_call.1} parent=1 // pred_region
      %s36 = ssub.s32 128, 128
      %37 = vsyncadd [#allocation6], %s36
      %s39 = sshll.u32 [#allocation7], 4
      %s40 = int_to_ptr.vmem [resolvable:$true] %s39
      %42 = dma.hbm_to_vmem [thread:$0]  %s2, 128, %s40, [#allocation6]
    $region13: #{tpu_custom_call.1} parent=1 // pred_fallthru
      _
    // Predicated region
    $region14: #{tpu_custom_call.1} parent=1 // pred_check
      _
    $region15: #{tpu_custom_call.1} parent=1 // pred_check_branch
      %44 = sbr.rel (0) target = $region17
    $region16: #{tpu_custom_call.1} parent=1 // pred_region
      %45 = dma.done [#allocation3], 256
    $region17: #{tpu_custom_call.1} parent=1 // pred_fallthru
      _
    // Predicated region
    $region18: #{tpu_custom_call.1} parent=1 // pred_check
      _
    $region19: #{tpu_custom_call.1} parent=1 // pred_check_branch
      %47 = sbr.rel (0) target = $region21
    $region20: #{tpu_custom_call.1} parent=1 // pred_region
      %48 = dma.done [#allocation6], 20480
    $region21: #{tpu_custom_call.1} parent=1 // pred_fallthru
      _
    // Predicated region
    $region22: #{tpu_custom_call.1} parent=1 // pred_check
      _
    $region23: #{tpu_custom_call.1} parent=1 // pred_check_branch
      %50 = sbr.rel (0) target = $region25
    $region24: #{tpu_custom_call.1} parent=1 // pred_region
      %51 = dma.done [#allocation6], 128
    $region25: #{tpu_custom_call.1} parent=1 // pred_fallthru
      _
    %v52 = vld [vmem:[#allocation2] sm:$0xff]
    %v53 = vld [vmem:[#allocation2 + $0x8] sm:$0xff]
    %v54 = vld [vmem:[#allocation5] sm:$0xff]
    %v55 = vld [vmem:[#allocation5 + $0x8] sm:$0xff]
    %v56 = vld [vmem:[#allocation5 + $0x28] sm:$0xff]
    %v57 = vld [vmem:[#allocation5 + $0x30] sm:$0xff]
    %v58 = vld [vmem:[#allocation5 + $0x50] sm:$0xff]
    %v59 = vld [vmem:[#allocation5 + $0x58] sm:$0xff]
    %v60 = vld [vmem:[#allocation5 + $0x78] sm:$0xff]
    %v61 = vld [vmem:[#allocation5 + $0x80] sm:$0xff]
    %v62 = vld [vmem:[#allocation5 + $0xa0] sm:$0xff]
    %v63 = vld [vmem:[#allocation5 + $0xa8] sm:$0xff]
    %v64 = vld [vmem:[#allocation5 + $0xc8] sm:$0xff]
    %v65 = vld [vmem:[#allocation5 + $0xd0] sm:$0xff]
    %v66 = vld [vmem:[#allocation5 + $0xf0] sm:$0xff]
    %v67 = vld [vmem:[#allocation5 + $0xf8] sm:$0xff]
    %v68 = vld [vmem:[#allocation5 + $0x118] sm:$0xff]
    %v69 = vld [vmem:[#allocation5 + $0x120] sm:$0xff]
    %v70 = vld [vmem:[#allocation5 + $0x140] sm:$0xff]
    %v71 = vld [vmem:[#allocation5 + $0x148] sm:$0xff]
    %v72 = vld [vmem:[#allocation5 + $0x168] sm:$0xff]
    %v73 = vld [vmem:[#allocation5 + $0x170] sm:$0xff]
    %v74 = vld [vmem:[#allocation5 + $0x190] sm:$0xff]
    %v75 = vld [vmem:[#allocation5 + $0x198] sm:$0xff]
    %v76 = vld [vmem:[#allocation5 + $0x1b8] sm:$0xff]
    %v77 = vld [vmem:[#allocation5 + $0x1c0] sm:$0xff]
    %v78 = vld [vmem:[#allocation5 + $0x1e0] sm:$0xff]
    %v79 = vld [vmem:[#allocation5 + $0x1e8] sm:$0xff]
    %v80 = vld [vmem:[#allocation5 + $0x208] sm:$0xff]
    %v81 = vld [vmem:[#allocation5 + $0x210] sm:$0xff]
    %v82 = vld [vmem:[#allocation5 + $0x230] sm:$0xff]
    %v83 = vld [vmem:[#allocation5 + $0x238] sm:$0xff]
    %v84 = vld [vmem:[#allocation5 + $0x258] sm:$0xff]
    %v85 = vld [vmem:[#allocation5 + $0x260] sm:$0xff]
    %v86 = vld [vmem:[#allocation5 + $0x280] sm:$0xff]
    %v87 = vld [vmem:[#allocation5 + $0x288] sm:$0xff]
    %v88 = vld [vmem:[#allocation5 + $0x2a8] sm:$0xff]
    %v89 = vld [vmem:[#allocation5 + $0x2b0] sm:$0xff]
    %v90 = vld [vmem:[#allocation5 + $0x2d0] sm:$0xff]
    %v91 = vld [vmem:[#allocation5 + $0x2d8] sm:$0xff]
    %v92 = vld [vmem:[#allocation5 + $0x2f8] sm:$0xff]
    %v93 = vld [vmem:[#allocation5 + $0x300] sm:$0xff]
    %v94 = vld [vmem:[#allocation5 + $0x320] sm:$0xff]
    %v95 = vld [vmem:[#allocation5 + $0x328] sm:$0xff]
    %v96 = vld [vmem:[#allocation5 + $0x348] sm:$0xff]
    %v97 = vld [vmem:[#allocation5 + $0x350] sm:$0xff]
    %v98 = vld [vmem:[#allocation5 + $0x370] sm:$0xff]
    %v99 = vld [vmem:[#allocation5 + $0x378] sm:$0xff]
    %v100 = vld [vmem:[#allocation5 + $0x398] sm:$0xff]
    %v101 = vld [vmem:[#allocation5 + $0x3a0] sm:$0xff]
    %v102 = vld [vmem:[#allocation5 + $0x3c0] sm:$0xff]
    %v103 = vld [vmem:[#allocation5 + $0x3c8] sm:$0xff]
    %v104 = vld [vmem:[#allocation5 + $0x3e8] sm:$0xff]
    %v105 = vld [vmem:[#allocation5 + $0x3f0] sm:$0xff]
    %v106 = vld [vmem:[#allocation5 + $0x410] sm:$0xff]
    %v107 = vld [vmem:[#allocation5 + $0x418] sm:$0xff]
    %v108 = vld [vmem:[#allocation5 + $0x438] sm:$0xff]
    %v109 = vld [vmem:[#allocation5 + $0x440] sm:$0xff]
    %v110 = vld [vmem:[#allocation5 + $0x460] sm:$0xff]
    %v111 = vld [vmem:[#allocation5 + $0x468] sm:$0xff]
    %v112 = vld [vmem:[#allocation5 + $0x488] sm:$0xff]
    %v113 = vld [vmem:[#allocation5 + $0x490] sm:$0xff]
    %v114 = vld [vmem:[#allocation5 + $0x4b0] sm:$0xff]
    %v115 = vld [vmem:[#allocation5 + $0x4b8] sm:$0xff]
    %v116 = vld [vmem:[#allocation5 + $0x4d8] sm:$0xff]
    %v117 = vld [vmem:[#allocation5 + $0x4e0] sm:$0xff]
    %v118 = vld [vmem:[#allocation5 + $0x10] sm:$0xff]
    %v119 = vld [vmem:[#allocation5 + $0x18] sm:$0xff]
    %v120 = vld [vmem:[#allocation5 + $0x38] sm:$0xff]
    %v121 = vld [vmem:[#allocation5 + $0x40] sm:$0xff]
    %v122 = vld [vmem:[#allocation5 + $0x60] sm:$0xff]
    %v123 = vld [vmem:[#allocation5 + $0x68] sm:$0xff]
    %v124 = vld [vmem:[#allocation5 + $0x88] sm:$0xff]
    %v125 = vld [vmem:[#allocation5 + $0x90] sm:$0xff]
    %v126 = vld [vmem:[#allocation5 + $0xb0] sm:$0xff]
    %v127 = vld [vmem:[#allocation5 + $0xb8] sm:$0xff]
    %v128 = vld [vmem:[#allocation5 + $0xd8] sm:$0xff]
    %v129 = vld [vmem:[#allocation5 + $0xe0] sm:$0xff]
    %v130 = vld [vmem:[#allocation5 + $0x100] sm:$0xff]
    %v131 = vld [vmem:[#allocation5 + $0x108] sm:$0xff]
    %v132 = vld [vmem:[#allocation5 + $0x128] sm:$0xff]
    %v133 = vld [vmem:[#allocation5 + $0x130] sm:$0xff]
    %v134 = vld [vmem:[#allocation5 + $0x150] sm:$0xff]
    %v135 = vld [vmem:[#allocation5 + $0x158] sm:$0xff]
    %v136 = vld [vmem:[#allocation5 + $0x178] sm:$0xff]
    %v137 = vld [vmem:[#allocation5 + $0x180] sm:$0xff]
    %v138 = vld [vmem:[#allocation5 + $0x1a0] sm:$0xff]
    %v139 = vld [vmem:[#allocation5 + $0x1a8] sm:$0xff]
    %v140 = vld [vmem:[#allocation5 + $0x1c8] sm:$0xff]
    %v141 = vld [vmem:[#allocation5 + $0x1d0] sm:$0xff]
    %v142 = vld [vmem:[#allocation5 + $0x1f0] sm:$0xff]
    %v143 = vld [vmem:[#allocation5 + $0x1f8] sm:$0xff]
    %v144 = vld [vmem:[#allocation5 + $0x218] sm:$0xff]
    %v145 = vld [vmem:[#allocation5 + $0x220] sm:$0xff]
    %v146 = vld [vmem:[#allocation5 + $0x240] sm:$0xff]
    %v147 = vld [vmem:[#allocation5 + $0x248] sm:$0xff]
    %v148 = vld [vmem:[#allocation5 + $0x268] sm:$0xff]
    %v149 = vld [vmem:[#allocation5 + $0x270] sm:$0xff]
    %v150 = vld [vmem:[#allocation5 + $0x290] sm:$0xff]
    %v151 = vld [vmem:[#allocation5 + $0x298] sm:$0xff]
    %v152 = vld [vmem:[#allocation5 + $0x2b8] sm:$0xff]
    %v153 = vld [vmem:[#allocation5 + $0x2c0] sm:$0xff]
    %v154 = vld [vmem:[#allocation5 + $0x2e0] sm:$0xff]
    %v155 = vld [vmem:[#allocation5 + $0x2e8] sm:$0xff]
    %v156 = vld [vmem:[#allocation5 + $0x308] sm:$0xff]
    %v157 = vld [vmem:[#allocation5 + $0x310] sm:$0xff]
    %v158 = vld [vmem:[#allocation5 + $0x330] sm:$0xff]
    %v159 = vld [vmem:[#allocation5 + $0x338] sm:$0xff]
    %v160 = vld [vmem:[#allocation5 + $0x358] sm:$0xff]
    %v161 = vld [vmem:[#allocation5 + $0x360] sm:$0xff]
    %v162 = vld [vmem:[#allocation5 + $0x380] sm:$0xff]
    %v163 = vld [vmem:[#allocation5 + $0x388] sm:$0xff]
    %v164 = vld [vmem:[#allocation5 + $0x3a8] sm:$0xff]
    %v165 = vld [vmem:[#allocation5 + $0x3b0] sm:$0xff]
    %v166 = vld [vmem:[#allocation5 + $0x3d0] sm:$0xff]
    %v167 = vld [vmem:[#allocation5 + $0x3d8] sm:$0xff]
    %v168 = vld [vmem:[#allocation5 + $0x3f8] sm:$0xff]
    %v169 = vld [vmem:[#allocation5 + $0x400] sm:$0xff]
    %v170 = vld [vmem:[#allocation5 + $0x420] sm:$0xff]
    %v171 = vld [vmem:[#allocation5 + $0x428] sm:$0xff]
    %v172 = vld [vmem:[#allocation5 + $0x448] sm:$0xff]
    %v173 = vld [vmem:[#allocation5 + $0x450] sm:$0xff]
    %v174 = vld [vmem:[#allocation5 + $0x470] sm:$0xff]
    %v175 = vld [vmem:[#allocation5 + $0x478] sm:$0xff]
    %v176 = vld [vmem:[#allocation5 + $0x498] sm:$0xff]
    %v177 = vld [vmem:[#allocation5 + $0x4a0] sm:$0xff]
    %v178 = vld [vmem:[#allocation5 + $0x4c0] sm:$0xff]
    %v179 = vld [vmem:[#allocation5 + $0x4c8] sm:$0xff]
    %v180 = vld [vmem:[#allocation5 + $0x4e8] sm:$0xff]
    %v181 = vld [vmem:[#allocation5 + $0x4f0] sm:$0xff]
    %v182 = vld [vmem:[#allocation5 + $0x20] sm:$0xff]
    %v183 = vld [vmem:[#allocation5 + $0x48] sm:$0xff]
    %v184 = vld [vmem:[#allocation5 + $0x70] sm:$0xff]
    %v185 = vld [vmem:[#allocation5 + $0x98] sm:$0xff]
    %v186 = vld [vmem:[#allocation5 + $0xc0] sm:$0xff]
    %v187 = vld [vmem:[#allocation5 + $0xe8] sm:$0xff]
    %v188 = vld [vmem:[#allocation5 + $0x110] sm:$0xff]
    %v189 = vld [vmem:[#allocation5 + $0x138] sm:$0xff]
    %v190 = vld [vmem:[#allocation5 + $0x160] sm:$0xff]
    %v191 = vld [vmem:[#allocation5 + $0x188] sm:$0xff]
    %v192 = vld [vmem:[#allocation5 + $0x1b0] sm:$0xff]
    %v193 = vld [vmem:[#allocation5 + $0x1d8] sm:$0xff]
    %v194 = vld [vmem:[#allocation5 + $0x200] sm:$0xff]
    %v195 = vld [vmem:[#allocation5 + $0x228] sm:$0xff]
    %v196 = vld [vmem:[#allocation5 + $0x250] sm:$0xff]
    %v197 = vld [vmem:[#allocation5 + $0x278] sm:$0xff]
    %v198 = vld [vmem:[#allocation5 + $0x2a0] sm:$0xff]
    %v199 = vld [vmem:[#allocation5 + $0x2c8] sm:$0xff]
    %v200 = vld [vmem:[#allocation5 + $0x2f0] sm:$0xff]
    %v201 = vld [vmem:[#allocation5 + $0x318] sm:$0xff]
    %v202 = vld [vmem:[#allocation5 + $0x340] sm:$0xff]
    %v203 = vld [vmem:[#allocation5 + $0x368] sm:$0xff]
    %v204 = vld [vmem:[#allocation5 + $0x390] sm:$0xff]
    %v205 = vld [vmem:[#allocation5 + $0x3b8] sm:$0xff]
    %v206 = vld [vmem:[#allocation5 + $0x3e0] sm:$0xff]
    %v207 = vld [vmem:[#allocation5 + $0x408] sm:$0xff]
    %v208 = vld [vmem:[#allocation5 + $0x430] sm:$0xff]
    %v209 = vld [vmem:[#allocation5 + $0x458] sm:$0xff]
    %v210 = vld [vmem:[#allocation5 + $0x480] sm:$0xff]
    %v211 = vld [vmem:[#allocation5 + $0x4a8] sm:$0xff]
    %v212 = vld [vmem:[#allocation5 + $0x4d0] sm:$0xff]
    %v213 = vld [vmem:[#allocation5 + $0x4f8] sm:$0xff]
    %v214 = vld [vmem:[#allocation7] ss:$4 sm:$0x3]
    %s215 = scalar_lea.vmem [#allocation7], 1
    %v216 = vld [vmem:[%s215] ss:$4 sm:$0x3]
    %s217 = scalar_lea.vmem [#allocation7], 2
    %v218 = vld [vmem:[%s217] ss:$4 sm:$0x3]
    %v219 = vld [vmem:[#allocation7 + $0x3] sm:$0x1]
    %v221 = vlaneseq
    %v222 = vshrl.u32 %v221, 7
    %v223 = vsub.s32 0, %v222
    %v224 = vrot.slane %v214, %v223
    %v225 = vlaneseq
    %v226 = vshrl.u32 %v225, 7
    %v227 = vsub.s32 1, %v226
    %v228 = vrot.slane %v214, %v227
    %231 = vmatprep.subr.mxu0 %v85
    %232 = vmatpush1.msra.mxu0 %v84
    %233 = vmatprep.subr.mxu0 %v83
    %234 = vmatpush1.msra.mxu0 %v82
    %235 = vmatprep.subr.mxu0 %v81
    %236 = vmatpush1.msra.mxu0 %v80
    %237 = vmatprep.subr.mxu0 %v79
    %238 = vmatpush1.msra.mxu0 %v78
    %239 = vmatprep.subr.mxu0 %v77
    %240 = vmatpush1.msra.mxu0 %v76
    %241 = vmatprep.subr.mxu0 %v75
    %242 = vmatpush1.msra.mxu0 %v74
    %243 = vmatprep.subr.mxu0 %v73
    %244 = vmatpush1.msra.mxu0 %v72
    %245 = vmatprep.subr.mxu0 %v71
    %246 = vmatpush1.msra.mxu0 %v70
    %247 = vmatprep.subr.mxu0 %v69
    %248 = vmatpush1.msra.mxu0 %v68
    %249 = vmatprep.subr.mxu0 %v67
    %250 = vmatpush1.msra.mxu0 %v66
    %251 = vmatprep.subr.mxu0 %v65
    %252 = vmatpush1.msra.mxu0 %v64
    %253 = vmatprep.subr.mxu0 %v63
    %254 = vmatpush1.msra.mxu0 %v62
    %255 = vmatprep.subr.mxu0 %v61
    %256 = vmatpush1.msra.mxu0 %v60
    %257 = vmatprep.subr.mxu0 %v59
    %258 = vmatpush1.msra.mxu0 %v58
    %259 = vmatprep.subr.mxu0 %v57
    %260 = vmatpush1.msra.mxu0 %v56
    %261 = vmatprep.subr.mxu0 %v55
    %262 = vmatpush1.msra.mxu0 %v54
    %263 = vmatprep.subr.mxu0 0.0
    %264 = vmatpush2.msra.mxu0 0.0
    %265 = vmatprep.subr.mxu0 0.0
    %266 = vmatpush2.msra.mxu0 0.0
    %267 = vmatprep.subr.mxu0 0.0
    %268 = vmatpush2.msra.mxu0 0.0
    %269 = vmatprep.subr.mxu0 0.0
    %270 = vmatpush2.msra.mxu0 0.0
    %271 = vmatprep.subr.mxu0 0.0
    %272 = vmatpush2.msra.mxu0 0.0
    %273 = vmatprep.subr.mxu0 0.0
    %274 = vmatpush2.msra.mxu0 0.0
    %275 = vmatprep.subr.mxu0 0.0
    %276 = vmatpush2.msra.mxu0 0.0
    %277 = vmatprep.subr.mxu0 0.0
    %278 = vmatpush2.msra.mxu0 0.0
    %279 = vmatprep.subr.mxu0 0.0
    %280 = vmatpush2.msra.mxu0 0.0
    %281 = vmatprep.subr.mxu0 0.0
    %282 = vmatpush2.msra.mxu0 0.0
    %283 = vmatprep.subr.mxu0 0.0
    %284 = vmatpush2.msra.mxu0 0.0
    %285 = vmatprep.subr.mxu0 0.0
    %286 = vmatpush2.msra.mxu0 0.0
    %287 = vmatprep.subr.mxu0 0.0
    %288 = vmatpush2.msra.mxu0 0.0
    %289 = vmatprep.subr.mxu0 0.0
    %290 = vmatpush2.msra.mxu0 0.0
    %291 = vmatprep.subr.mxu0 0.0
    %292 = vmatpush2.msra.mxu0 0.0
    %293 = vmatprep.subr.mxu0 0.0
    %294 = vmatpush2.msra.mxu0 0.0
    %295 = vmatprep.mubr.f32.mxu0 0.0
    %296 = vmatmul.mubr.f32.gmra.mxu0 %v52
    %v297 = vpop.f32.mrf.mxu0
    %v298 = vadd.f32 %v224, %v297
    %v299 = vpop.f32.mrf.mxu0
    %v300 = vadd.f32 %v228, %v299
    %301 = vdwg.mxu0
    %v302 = vmax.f32 %v298, 0.0
    %v303 = vmax.f32 %v300, 0.0
    %v305 = vlaneseq
    %v306 = vshrl.u32 %v305, 7
    %v307 = vsub.s32 0, %v306
    %v308 = vrot.slane %v216, %v307
    %v309 = vlaneseq
    %v310 = vshrl.u32 %v309, 7
    %v311 = vsub.s32 1, %v310
    %v312 = vrot.slane %v216, %v311
    %315 = vmatprep.subr.mxu0 %v149
    %316 = vmatpush1.msra.mxu0 %v148
    %317 = vmatprep.subr.mxu0 %v147
    %318 = vmatpush1.msra.mxu0 %v146
    %319 = vmatprep.subr.mxu0 %v145
    %320 = vmatpush1.msra.mxu0 %v144
    %321 = vmatprep.subr.mxu0 %v143
    %322 = vmatpush1.msra.mxu0 %v142
    %323 = vmatprep.subr.mxu0 %v141
    %324 = vmatpush1.msra.mxu0 %v140
    %325 = vmatprep.subr.mxu0 %v139
    %326 = vmatpush1.msra.mxu0 %v138
    %327 = vmatprep.subr.mxu0 %v137
    %328 = vmatpush1.msra.mxu0 %v136
    %329 = vmatprep.subr.mxu0 %v135
    %330 = vmatpush1.msra.mxu0 %v134
    %331 = vmatprep.subr.mxu0 %v133
    %332 = vmatpush1.msra.mxu0 %v132
    %333 = vmatprep.subr.mxu0 %v131
    %334 = vmatpush1.msra.mxu0 %v130
    %335 = vmatprep.subr.mxu0 %v129
    %336 = vmatpush1.msra.mxu0 %v128
    %337 = vmatprep.subr.mxu0 %v127
    %338 = vmatpush1.msra.mxu0 %v126
    %339 = vmatprep.subr.mxu0 %v125
    %340 = vmatpush1.msra.mxu0 %v124
    %341 = vmatprep.subr.mxu0 %v123
    %342 = vmatpush1.msra.mxu0 %v122
    %343 = vmatprep.subr.mxu0 %v121
    %344 = vmatpush1.msra.mxu0 %v120
    %345 = vmatprep.subr.mxu0 %v119
    %346 = vmatpush1.msra.mxu0 %v118
    %347 = vmatprep.subr.mxu0 %v181
    %348 = vmatpush2.msra.mxu0 %v180
    %349 = vmatprep.subr.mxu0 %v179
    %350 = vmatpush2.msra.mxu0 %v178
    %351 = vmatprep.subr.mxu0 %v177
    %352 = vmatpush2.msra.mxu0 %v176
    %353 = vmatprep.subr.mxu0 %v175
    %354 = vmatpush2.msra.mxu0 %v174
    %355 = vmatprep.subr.mxu0 %v173
    %356 = vmatpush2.msra.mxu0 %v172
    %357 = vmatprep.subr.mxu0 %v171
    %358 = vmatpush2.msra.mxu0 %v170
    %359 = vmatprep.subr.mxu0 %v169
    %360 = vmatpush2.msra.mxu0 %v168
    %361 = vmatprep.subr.mxu0 %v167
    %362 = vmatpush2.msra.mxu0 %v166
    %363 = vmatprep.subr.mxu0 %v165
    %364 = vmatpush2.msra.mxu0 %v164
    %365 = vmatprep.subr.mxu0 %v163
    %366 = vmatpush2.msra.mxu0 %v162
    %367 = vmatprep.subr.mxu0 %v161
    %368 = vmatpush2.msra.mxu0 %v160
    %369 = vmatprep.subr.mxu0 %v159
    %370 = vmatpush2.msra.mxu0 %v158
    %371 = vmatprep.subr.mxu0 %v157
    %372 = vmatpush2.msra.mxu0 %v156
    %373 = vmatprep.subr.mxu0 %v155
    %374 = vmatpush2.msra.mxu0 %v154
    %375 = vmatprep.subr.mxu0 %v153
    %376 = vmatpush2.msra.mxu0 %v152
    %377 = vmatprep.subr.mxu0 %v151
    %378 = vmatpush2.msra.mxu0 %v150
    %379 = vmatprep.mubr.f32.mxu0 %v303
    %380 = vmatmul.mubr.f32.gmra.mxu0 %v302
    %v381 = vpop.f32.mrf.mxu0
    %v382 = vadd.f32 %v308, %v381
    %v383 = vpop.f32.mrf.mxu0
    %v384 = vadd.f32 %v312, %v383
    %385 = vdwg.mxu0
    %v386 = vmul.f32 %v384, 0.5
    %v387 = vmul.f32 %v386, 1.442695
    %v388 = vpow.pop %v387
    %v389 = vmul.f32 %v53, %v388
    %v390 = vadd.f32 %v382, %v389
    %v392 = vlaneseq
    %v393 = vshrl.u32 %v392, 7
    %v394 = vsub.s32 0, %v393
    %v395 = vrot.slane %v218, %v394
    %v396 = vlaneseq
    %v397 = vshrl.u32 %v396, 7
    %v398 = vsub.s32 1, %v397
    %v399 = vrot.slane %v218, %v398
    %402 = vmatprep.subr.mxu0 %v117
    %403 = vmatpush1.msra.mxu0 %v116
    %404 = vmatprep.subr.mxu0 %v115
    %405 = vmatpush1.msra.mxu0 %v114
    %406 = vmatprep.subr.mxu0 %v113
    %407 = vmatpush1.msra.mxu0 %v112
    %408 = vmatprep.subr.mxu0 %v111
    %409 = vmatpush1.msra.mxu0 %v110
    %410 = vmatprep.subr.mxu0 %v109
    %411 = vmatpush1.msra.mxu0 %v108
    %412 = vmatprep.subr.mxu0 %v107
    %413 = vmatpush1.msra.mxu0 %v106
    %414 = vmatprep.subr.mxu0 %v105
    %415 = vmatpush1.msra.mxu0 %v104
    %416 = vmatprep.subr.mxu0 %v103
    %417 = vmatpush1.msra.mxu0 %v102
    %418 = vmatprep.subr.mxu0 %v101
    %419 = vmatpush1.msra.mxu0 %v100
    %420 = vmatprep.subr.mxu0 %v99
    %421 = vmatpush1.msra.mxu0 %v98
    %422 = vmatprep.subr.mxu0 %v97
    %423 = vmatpush1.msra.mxu0 %v96
    %424 = vmatprep.subr.mxu0 %v95
    %425 = vmatpush1.msra.mxu0 %v94
    %426 = vmatprep.subr.mxu0 %v93
    %427 = vmatpush1.msra.mxu0 %v92
    %428 = vmatprep.subr.mxu0 %v91
    %429 = vmatpush1.msra.mxu0 %v90
    %430 = vmatprep.subr.mxu0 %v89
    %431 = vmatpush1.msra.mxu0 %v88
    %432 = vmatprep.subr.mxu0 %v87
    %433 = vmatpush1.msra.mxu0 %v86
    %434 = vmatprep.subr.mxu0 0.0
    %435 = vmatpush2.msra.mxu0 0.0
    %436 = vmatprep.subr.mxu0 0.0
    %437 = vmatpush2.msra.mxu0 0.0
    %438 = vmatprep.subr.mxu0 0.0
    %439 = vmatpush2.msra.mxu0 0.0
    %440 = vmatprep.subr.mxu0 0.0
    %441 = vmatpush2.msra.mxu0 0.0
    %442 = vmatprep.subr.mxu0 0.0
    %443 = vmatpush2.msra.mxu0 0.0
    %444 = vmatprep.subr.mxu0 0.0
    %445 = vmatpush2.msra.mxu0 0.0
    %446 = vmatprep.subr.mxu0 0.0
    %447 = vmatpush2.msra.mxu0 0.0
    %448 = vmatprep.subr.mxu0 0.0
    %449 = vmatpush2.msra.mxu0 0.0
    %450 = vmatprep.subr.mxu0 0.0
    %451 = vmatpush2.msra.mxu0 0.0
    %452 = vmatprep.subr.mxu0 0.0
    %453 = vmatpush2.msra.mxu0 0.0
    %454 = vmatprep.subr.mxu0 0.0
    %455 = vmatpush2.msra.mxu0 0.0
    %456 = vmatprep.subr.mxu0 0.0
    %457 = vmatpush2.msra.mxu0 0.0
    %458 = vmatprep.subr.mxu0 0.0
    %459 = vmatpush2.msra.mxu0 0.0
    %460 = vmatprep.subr.mxu0 0.0
    %461 = vmatpush2.msra.mxu0 0.0
    %462 = vmatprep.subr.mxu0 0.0
    %463 = vmatpush2.msra.mxu0 0.0
    %464 = vmatprep.subr.mxu0 0.0
    %465 = vmatpush2.msra.mxu0 0.0
    %466 = vmatprep.mubr.f32.mxu0 0.0
    %467 = vmatmul.mubr.f32.gmra.mxu0 %v390
    %v468 = vpop.f32.mrf.mxu0
    %v469 = vadd.f32 %v395, %v468
    %v470 = vpop.f32.mrf.mxu0
    %v471 = vadd.f32 %v399, %v470
    %472 = vdwg.mxu0
    %v473 = vmax.f32 %v469, 0.0
    %v474 = vmax.f32 %v471, 0.0
    %v475 = vlaneseq
    %v476 = vshrl.u32 %v475, 7
    %v477 = vsub.s32 0, %v476
    %v478 = vrot.slane %v219, %v477
    %479 = vmatprep.subr.mxu0 0.0
    %480 = vmatpush1.msra.mxu0 %v197
    %481 = vmatprep.subr.mxu0 0.0
    %482 = vmatpush1.msra.mxu0 %v196
    %483 = vmatprep.subr.mxu0 0.0
    %484 = vmatpush1.msra.mxu0 %v195
    %485 = vmatprep.subr.mxu0 0.0
    %486 = vmatpush1.msra.mxu0 %v194
    %487 = vmatprep.subr.mxu0 0.0
    %488 = vmatpush1.msra.mxu0 %v193
    %489 = vmatprep.subr.mxu0 0.0
    %490 = vmatpush1.msra.mxu0 %v192
    %491 = vmatprep.subr.mxu0 0.0
    %492 = vmatpush1.msra.mxu0 %v191
    %493 = vmatprep.subr.mxu0 0.0
    %494 = vmatpush1.msra.mxu0 %v190
    %495 = vmatprep.subr.mxu0 0.0
    %496 = vmatpush1.msra.mxu0 %v189
    %497 = vmatprep.subr.mxu0 0.0
    %498 = vmatpush1.msra.mxu0 %v188
    %499 = vmatprep.subr.mxu0 0.0
    %500 = vmatpush1.msra.mxu0 %v187
    %501 = vmatprep.subr.mxu0 0.0
    %502 = vmatpush1.msra.mxu0 %v186
    %503 = vmatprep.subr.mxu0 0.0
    %504 = vmatpush1.msra.mxu0 %v185
    %505 = vmatprep.subr.mxu0 0.0
    %506 = vmatpush1.msra.mxu0 %v184
    %507 = vmatprep.subr.mxu0 0.0
    %508 = vmatpush1.msra.mxu0 %v183
    %509 = vmatprep.subr.mxu0 0.0
    %510 = vmatpush1.msra.mxu0 %v182
    %511 = vmatprep.subr.mxu0 0.0
    %512 = vmatpush2.msra.mxu0 %v213
    %513 = vmatprep.subr.mxu0 0.0
    %514 = vmatpush2.msra.mxu0 %v212
    %515 = vmatprep.subr.mxu0 0.0
    %516 = vmatpush2.msra.mxu0 %v211
    %517 = vmatprep.subr.mxu0 0.0
    %518 = vmatpush2.msra.mxu0 %v210
    %519 = vmatprep.subr.mxu0 0.0
    %520 = vmatpush2.msra.mxu0 %v209
    %521 = vmatprep.subr.mxu0 0.0
    %522 = vmatpush2.msra.mxu0 %v208
    %523 = vmatprep.subr.mxu0 0.0
    %524 = vmatpush2.msra.mxu0 %v207
    %525 = vmatprep.subr.mxu0 0.0
    %526 = vmatpush2.msra.mxu0 %v206
    %527 = vmatprep.subr.mxu0 0.0
    %528 = vmatpush2.msra.mxu0 %v205
    %529 = vmatprep.subr.mxu0 0.0
    %530 = vmatpush2.msra.mxu0 %v204
    %531 = vmatprep.subr.mxu0 0.0
    %532 = vmatpush2.msra.mxu0 %v203
    %533 = vmatprep.subr.mxu0 0.0
    %534 = vmatpush2.msra.mxu0 %v202
    %535 = vmatprep.subr.mxu0 0.0
    %536 = vmatpush2.msra.mxu0 %v201
    %537 = vmatprep.subr.mxu0 0.0
    %538 = vmatpush2.msra.mxu0 %v200
    %539 = vmatprep.subr.mxu0 0.0
    %540 = vmatpush2.msra.mxu0 %v199
    %541 = vmatprep.subr.mxu0 0.0
    %542 = vmatpush2.msra.mxu0 %v198
    %543 = vmatprep.mubr.f32.mxu0 %v474
    %544 = vmatmul.mubr.f32.gmra.mxu0 %v473
    %v545 = vpop.f32.mrf.mxu0
    %v546 = vadd.f32 %v478, %v545
    %v547 = vpop.f32.mrf.mxu0
    %548 = vdwg.mxu0
    %549 = vst [vmem:[#allocation8] sm:$0xff] %v546
    %550 = vst [vmem:[#allocation8 + $0x8] sm:$0xff] %v382
    %551 = vst [vmem:[#allocation8 + $0x10] sm:$0xff] %v384
    // Predicated region
    $region26: #{tpu_custom_call.1} parent=1 // pred_check
      _
    $region27: #{tpu_custom_call.1} parent=1 // pred_check_branch
      %553 = sbr.rel (0) target = $region29
    $region28: #{tpu_custom_call.1} parent=1 // pred_region
      %s555 = ssub.s32 384, 384
      %556 = vsyncadd [#allocation4], %s555
      %s558 = sshll.u32 [#allocation8], 4
      %s559 = int_to_ptr.vmem [resolvable:$true] %s558
      %561 = dma.vmem_to_hbm [thread:$0]  %s559, 384, %s3, [#allocation4]
    $region29: #{tpu_custom_call.1} parent=1 // pred_fallthru
      _
    // Predicated region
    $region30: #{tpu_custom_call.1} parent=1 // pred_check
      _
    $region31: #{tpu_custom_call.1} parent=1 // pred_check_branch
      %563 = sbr.rel (0) target = $region33
    $region32: #{tpu_custom_call.1} parent=1 // pred_region
      %564 = dma.done [#allocation4], 384
    $region33: #{tpu_custom_call.1} parent=1 // pred_fallthru
      _
    %565 = vsyncpa [#allocation3], 1
    %566 = vsyncpa [#allocation6], 1
    %567 = vsyncpa [#allocation4], 1

</llo_original>
